<compile_context>
chip_gen: v7x
topology: tpu7x:2x2x1
jax: 0.10.0
libtpu: 0.0.40
codegen_flags: <defaults>
</compile_context>

<pallas_src>
import jax
import jax.numpy as jnp
from jax.experimental import pallas as pl
from jax.experimental.pallas import tpu as pltpu


def _round_up(x, m):
    return ((x + m - 1) // m) * m


def _linear_kernel(x_ref, w_ref, b_ref, o_ref):
    # x_ref: (tm, K) f32 (cast to bf16 in-kernel), w_ref: (K, Np) bf16,
    # b_ref: (1, Np) f32, o_ref: (tm, Np) bf16.
    x = x_ref[...].astype(jnp.bfloat16)                      # VPU cast (packing only)
    acc = jnp.dot(x, w_ref[...], preferred_element_type=jnp.float32)
    o_ref[...] = (acc + b_ref[...]).astype(o_ref.dtype)      # bias in f32, cast on store


def pallas_linear(x2d, w, b, *, tm_target=512, out_dtype=jnp.bfloat16):
    """(M, K) @ (K, Nout) + (1, Nout) -> (M, Nout), tiled over M on the MXU."""
    M, K = x2d.shape
    Kw, Nout = w.shape
    assert K == Kw, (K, Kw)
    assert b.shape == (1, Nout), b.shape

    # --- Lane-dense output: pad Nout up to a multiple of 128 only if needed.
    n_pad = Nout if Nout % 128 == 0 else _round_up(Nout, 128)
    if n_pad != Nout:
        w = jnp.pad(w, ((0, 0), (0, n_pad - Nout)))
        b = jnp.pad(b, ((0, 0), (0, n_pad - Nout)))

    # --- M tiling: pad only to a sublane multiple (usually a no-op); pick the
    #     tile so the grid has >= 2 steps whenever possible (v7x megacore) and
    #     rely on Pallas edge-block handling for the non-divisible remainder.
    m8 = _round_up(M, 8)
    if m8 != M:
        x2d = jnp.pad(x2d, ((0, m8 - M), (0, 0)))
    min_tiles = 2 if m8 >= 16 else 1
    num_m = max(min_tiles, pl.cdiv(m8, tm_target))
    tm = min(_round_up(pl.cdiv(m8, num_m), 8), m8)
    grid_m = pl.cdiv(m8, tm)

    flops = 2 * m8 * K * n_pad
    bytes_accessed = (
        m8 * K * x2d.dtype.itemsize
        + K * n_pad * w.dtype.itemsize
        + n_pad * b.dtype.itemsize
        + m8 * n_pad * jnp.dtype(out_dtype).itemsize
    )

    y = pl.pallas_call(
        _linear_kernel,
        out_shape=jax.ShapeDtypeStruct((m8, n_pad), out_dtype),
        grid=(grid_m,),
        in_specs=[
            pl.BlockSpec((tm, K), lambda i: (i, 0)),     # activations: stream M tiles
            pl.BlockSpec((K, n_pad), lambda i: (0, 0)),  # weight: resident in VMEM
            pl.BlockSpec((1, n_pad), lambda i: (0, 0)),  # bias: resident in VMEM
        ],
        out_specs=pl.BlockSpec((tm, n_pad), lambda i: (i, 0)),
        compiler_params=pltpu.CompilerParams(
            dimension_semantics=("parallel",),
        ),
        cost_estimate=pl.CostEstimate(
            flops=flops, transcendentals=0, bytes_accessed=bytes_accessed
        ),
    )(x2d, w, b)

    if m8 != M or n_pad != Nout:
        y = y[:M, :Nout]
    return y


class SimpleDecoderPallas:
    def __init__(self, embed_dim=768, out_channels=3, patch_size=16, key=None,
                 param_dtype=jnp.bfloat16, out_dtype=jnp.bfloat16, tm=512):
        self.embed_dim = embed_dim
        self.out_channels = out_channels
        self.patch_size = patch_size
        self.tm = tm
        self.out_dtype = out_dtype
        nout = patch_size * patch_size * out_channels
        if key is None:
            key = jax.random.PRNGKey(0)
        kw, kb = jax.random.split(key)
        bound = 1.0 / (embed_dim ** 0.5)
        # nn.Linear-style init, stored transposed (K, Nout) in the PyTorch
        # column order (p1, p2, c).
        w_pt = jax.random.uniform(kw, (embed_dim, nout), jnp.float32,
                                  minval=-bound, maxval=bound)
        b_pt = jax.random.uniform(kb, (nout,), jnp.float32,
                                  minval=-bound, maxval=bound)
        self.weight_pt = w_pt          # f32, PyTorch (p1 p2 c) column order (reference)
        self.bias_pt = b_pt
        # Fold the per-token (p1 p2 c) -> (c p1 p2) permute of the rearrange
        # into the weight/bias column layout (zero runtime cost), and cast the
        # weight to bf16 once for the MXU.  Bias stays f32 (added post-accum).
        p, c = patch_size, out_channels
        w_perm = jnp.transpose(w_pt.reshape(embed_dim, p, p, c),
                               (0, 3, 1, 2)).reshape(embed_dim, nout)
        b_perm = jnp.transpose(b_pt.reshape(p, p, c), (2, 0, 1)).reshape(1, nout)
        self.weight = w_perm.astype(param_dtype)
        self.bias = b_perm

    def __call__(self, x, h, w):
        # x: (B, N, embed_dim), N == h*w.  No dtype cast here: the kernel
        # ingests x as-is and casts to bf16 on the VPU.
        B, N, D = x.shape
        assert N == h * w and D == self.embed_dim
        p = self.patch_size
        c = self.out_channels

        x2d = x.reshape(B * N, D)
        y2d = pallas_linear(x2d, self.weight, self.bias,
                            tm_target=self.tm, out_dtype=self.out_dtype)
        # y2d: (B*N, c*p*p) in per-token (c, p1, p2) order (weight pre-permuted).
        # Remaining rearrange 'b (h w) (c p1 p2) -> b c (h p1) (w p2)': the
        # minor p2 axis stays in place, so XLA moves contiguous p2-chunks.
        y = y2d.reshape(B, h, w, c, p, p)        # b h w c p1 p2
        y = jnp.transpose(y, (0, 3, 1, 4, 2, 5))  # b c h p1 w p2
        return y.reshape(B, c, h * p, w * p)


if __name__ == "__main__":
    # Small shapes consistent with the module.
    B = 2
    embed_dim = 32
    patch_size = 4
    out_channels = 3
    h, w = 2, 2
    N = h * w

    key = jax.random.PRNGKey(0)
    kx, kparams = jax.random.split(key)
    x = jax.random.normal(kx, (B, N, embed_dim), dtype=jnp.float32)

    decoder = SimpleDecoderPallas(
        embed_dim=embed_dim,
        out_channels=out_channels,
        patch_size=patch_size,
        key=kparams,
    )

    out = decoder(x, h, w)
    out = jax.block_until_ready(out)

    # Reference: plain JAX with the same bf16 operand rounding (f32 accum,
    # HIGHEST precision) and the original PyTorch weight layout + rearrange.
    x_q = x.astype(jnp.bfloat16).astype(jnp.float32)
    w_q = decoder.weight_pt.astype(jnp.bfloat16).astype(jnp.float32)
    y_ref = jnp.einsum(
        "bnd,dk->bnk", x_q, w_q, precision=jax.lax.Precision.HIGHEST
    ) + decoder.bias_pt
    y_ref = y_ref.reshape(B, h, w, patch_size, patch_size, out_channels)
    y_ref = jnp.transpose(y_ref, (0, 5, 1, 3, 2, 4)).reshape(
        B, out_channels, h * patch_size, w * patch_size
    )

    assert out.shape == (B, out_channels, h * patch_size, w * patch_size)
    assert jnp.allclose(out.astype(jnp.float32), y_ref, atol=3e-2, rtol=3e-2)

    print("KERNEL_OK")
</pallas_src>

<mosaic_0001>
module attributes {stable_mosaic.version = 11 : i64} {
  func.func @_linear_kernel(%arg0: i32, %arg1: memref<8x32xf32, #tpu.memory_space<vmem>>, %arg2: memref<32x128xbf16, #tpu.memory_space<vmem>>, %arg3: memref<1x128xf32, #tpu.memory_space<vmem>>, %arg4: memref<8x128xbf16, #tpu.memory_space<vmem>>) attributes {dimension_semantics = [#tpu.dimension_semantics<parallel>], iteration_bounds = array<i64: 1>, scalar_prefetch = 0 : i64, scratch_operands = 0 : i64, tpu.core_type = #tpu.core_type<tc>, window_params = [{transform_indices = @transform_0, window_bounds = array<i64: 8, 32>}, {pipeline_mode = #tpu.pipeline_mode<synchronous>, transform_indices = @transform_1, window_bounds = array<i64: 32, 128>}, {pipeline_mode = #tpu.pipeline_mode<synchronous>, transform_indices = @transform_2, window_bounds = array<i64: 1, 128>}, {transform_indices = @transform_3, window_bounds = array<i64: 8, 128>}]} {
    %c0 = arith.constant 0 : index
    %c0_0 = arith.constant 0 : index
    %0 = vector.load %arg1[%c0, %c0_0] : memref<8x32xf32, #tpu.memory_space<vmem>>, vector<8x32xf32>
    %1 = arith.truncf %0 : vector<8x32xf32> to vector<8x32xbf16>
    %c0_1 = arith.constant 0 : index
    %c0_2 = arith.constant 0 : index
    %2 = vector.load %arg2[%c0_1, %c0_2] : memref<32x128xbf16, #tpu.memory_space<vmem>>, vector<32x128xbf16>
    %cst = arith.constant dense<0.000000e+00> : vector<8x128xf32>
    %3 = tpu.matmul %1, %2, %cst {dimension_numbers = #tpu.dot_dimension_numbers<[1], [0], [0], [1], [0, 0, 1, 1], [], []>} : vector<8x32xbf16>, vector<32x128xbf16>, vector<8x128xf32> -> vector<8x128xf32>
    %c0_3 = arith.constant 0 : index
    %c0_4 = arith.constant 0 : index
    %4 = vector.load %arg3[%c0_3, %c0_4] : memref<1x128xf32, #tpu.memory_space<vmem>>, vector<1x128xf32>
    %5 = vector.broadcast %4 : vector<1x128xf32> to vector<8x128xf32>
    %6 = arith.addf %3, %5 : vector<8x128xf32>
    %7 = arith.truncf %6 : vector<8x128xf32> to vector<8x128xbf16>
    %c0_5 = arith.constant 0 : index
    %c0_6 = arith.constant 0 : index
    %8 = vector.load %arg4[%c0_5, %c0_6] : memref<8x128xbf16, #tpu.memory_space<vmem>>, vector<8x128xbf16>
    tpu.vector_store %arg4[%c0_5, %c0_6], %7 {strides = array<i32>} : memref<8x128xbf16, #tpu.memory_space<vmem>>, vector<8x128xbf16>,
    return
  }
  func.func @transform_0(%arg0: i32) -> (i32, i32) {
    %c0_i32 = arith.constant 0 : i32
    %c0_i32_0 = arith.constant 0 : i32
    return %arg0, %c0_i32 : i32, i32
  }
  func.func @transform_1(%arg0: i32) -> (i32, i32) {
    %c0_i32 = arith.constant 0 : i32
    %c0_i32_0 = arith.constant 0 : i32
    %c0_i32_1 = arith.constant 0 : i32
    return %c0_i32, %c0_i32_0 : i32, i32
  }
  func.func @transform_2(%arg0: i32) -> (i32, i32) {
    %c0_i32 = arith.constant 0 : i32
    %c0_i32_0 = arith.constant 0 : i32
    %c0_i32_1 = arith.constant 0 : i32
    return %c0_i32, %c0_i32_0 : i32, i32
  }
  func.func @transform_3(%arg0: i32) -> (i32, i32) {
    %c0_i32 = arith.constant 0 : i32
    %c0_i32_0 = arith.constant 0 : i32
    return %arg0, %c0_i32 : i32, i32
  }
}

</mosaic_0001>

<llo_original>
// kernel: tpu_custom_call.1
$region0: #{tpu_custom_call.1}
  #allocation0 [shape = 'u32[]', space=smem, size = 0x4, offset = 0x4, fixed_abs, tag = 'smem constant byte address 0x4 - core index']
  #allocation1 [shape = 'u32[144,128]{1,0:T(1,128)}', space=vmem, size = 0x12000, scoped, tag = 'internal scratch']
  %s0 = inlined_call_operand.hbm [shape: f32[8,32], index: 0, kind: input, shape index: {}]
  %s1 = inlined_call_operand.hbm [shape: bf16[32,128], index: 1, kind: input, shape index: {}]
  %s2 = inlined_call_operand.vmem [shape: f32[1,128], index: 2, kind: input, shape index: {}]
  %s3 = inlined_call_operand.hbm [shape: bf16[8,128], index: 3, kind: output, shape index: {}]
  %s4 = sld [smem:[#allocation0]]
  $region30: #{tpu_custom_call.1} parent=0
    _
  %s6 = ssub.s32 1, %s4
  %s7 = scalar_select 0, %s6, %s4
  $region1: #{tpu_custom_call.1} parent=0
    #allocation2 [shape = 'u8[4096]{0}', space=vmem, size = 0x1000, scoped, tag = 'input window, operand 0, single buffered']
    #allocation3 [shape = 's32[1]{0}', space=sflag, size = 0x4, scoped, tag = 'scoped memory for tpu_custom_call.1']
    #allocation4 [shape = 's32[1]{0}', space=sflag, size = 0x4, scoped, tag = 'scoped memory for tpu_custom_call.1']
    #allocation5 [shape = 'u8[8192]{0}', space=vmem, size = 0x2000, scoped, tag = 'input window, operand 1, single buffered']
    #allocation6 [shape = 's32[1]{0}', space=sflag, size = 0x4, scoped, tag = 'scoped memory for tpu_custom_call.1']
    #allocation7 [shape = 'u8[2048]{0}', space=vmem, size = 0x800, scoped, tag = 'output window, operand 0, single buffered']
    %8 = vsyncpa [#allocation3], 0
    %9 = vsyncpa [#allocation6], 0
    %10 = vsyncpa [#allocation4], 0
    // Predicated region
    $region2: #{tpu_custom_call.1} parent=1 // pred_check
      _
    $region3: #{tpu_custom_call.1} parent=1 // pred_check_branch
      %12 = sbr.rel (0) target = $region5
    $region4: #{tpu_custom_call.1} parent=1 // pred_region
      %s14 = ssub.s32 128, 128
      %15 = vsyncadd [#allocation3], %s14
      %s17 = sshll.u32 [#allocation2], 4
      %s18 = int_to_ptr.vmem [resolvable:$true] %s17
      %20 = dma.hbm_to_vmem [thread:$0]  %s0, 128, %s18, [#allocation3]
    $region5: #{tpu_custom_call.1} parent=1 // pred_fallthru
      _
    // Predicated region
    $region6: #{tpu_custom_call.1} parent=1 // pred_check
      _
    $region7: #{tpu_custom_call.1} parent=1 // pred_check_branch
      %22 = sbr.rel (0) target = $region9
    $region8: #{tpu_custom_call.1} parent=1 // pred_region
      %s24 = ssub.s32 256, 256
      %25 = vsyncadd [#allocation6], %s24
      %s26 = sshll.u32 [#allocation5], 4
      %s27 = int_to_ptr.vmem [resolvable:$true] %s26
      %32 = dma.hbm_to_vmem [thread:$0]  %s1, 256, %s27, [#allocation6], 64, 64, 4
    $region9: #{tpu_custom_call.1} parent=1 // pred_fallthru
      _
    // Predicated region
    $region10: #{tpu_custom_call.1} parent=1 // pred_check
      _
    $region11: #{tpu_custom_call.1} parent=1 // pred_check_branch
      %34 = sbr.rel (0) target = $region13
    $region12: #{tpu_custom_call.1} parent=1 // pred_region
      _
    $region13: #{tpu_custom_call.1} parent=1 // pred_fallthru
      _
    // Predicated region
    $region14: #{tpu_custom_call.1} parent=1 // pred_check
      _
    $region15: #{tpu_custom_call.1} parent=1 // pred_check_branch
      %36 = sbr.rel (0) target = $region17
    $region16: #{tpu_custom_call.1} parent=1 // pred_region
      %37 = dma.done [#allocation3], 128
    $region17: #{tpu_custom_call.1} parent=1 // pred_fallthru
      _
    // Predicated region
    $region18: #{tpu_custom_call.1} parent=1 // pred_check
      _
    $region19: #{tpu_custom_call.1} parent=1 // pred_check_branch
      %39 = sbr.rel (0) target = $region21
    $region20: #{tpu_custom_call.1} parent=1 // pred_region
      %40 = dma.done [#allocation6], 256
    $region21: #{tpu_custom_call.1} parent=1 // pred_fallthru
      _
    %v42 = vld [vmem:[#allocation2] sm:$0xff]
    %v43 = vpack.c.bf16 %v42, %v42
    %v44 = vld [vmem:[#allocation5] sm:$0xf]
    %v45 = vld [vmem:[#allocation5 + $0x4] sm:$0xf]
    %v46 = vld [vmem:[#allocation5 + $0x8] sm:$0xf]
    %v47 = vld [vmem:[#allocation5 + $0xc] sm:$0xf]
    %v48 = vld [vmem:[%s2] sm:$0x1]
    %v50 = vlaneseq
    %v51 = vshrl.u32 %v50, 7
    %v52 = vsub.s32 0, %v51
    %v53 = vrot.slane %v48, %v52
    %v59 = vunpack.c.l.b16 %v44
    %v60 = vunpack.c.l.b16 %v45
    %v61 = vunpack.c.l.b16 %v46
    %v62 = vunpack.c.l.b16 %v47
    %v63 = vpack.c.b16 %v60, %v59
    %v64 = vpack.c.b16 %v62, %v61
    %vm67 = vcmask 261120
    %v69 = vsel %vm67, %v43, 0
    %71 = vmatprep.subr.bf16.mxu0 0
    %72 = vmatpush1.bf16.msra.mxu0 %v63
    %73 = vmatprep.subr.bf16.mxu0 0
    %74 = vmatpush1.bf16.msra.mxu0 %v64
    %75 = vmatprep.subr.bf16.mxu0 0
    %76 = vmatpush1.bf16.msra.mxu0 0
    %77 = vmatprep.subr.bf16.mxu0 0
    %78 = vmatpush1.bf16.msra.mxu0 0
    %79 = vmatprep.subr.bf16.mxu0 0
    %80 = vmatpush1.bf16.msra.mxu0 0
    %81 = vmatprep.subr.bf16.mxu0 0
    %82 = vmatpush1.bf16.msra.mxu0 0
    %83 = vmatprep.subr.bf16.mxu0 0
    %84 = vmatpush1.bf16.msra.mxu0 0
    %85 = vmatprep.subr.bf16.mxu0 0
    %86 = vmatpush1.bf16.msra.mxu0 0
    %87 = vmatprep.subr.bf16.mxu0 0
    %88 = vmatpush1.bf16.msra.mxu0 0
    %89 = vmatprep.subr.bf16.mxu0 0
    %90 = vmatpush1.bf16.msra.mxu0 0
    %91 = vmatprep.subr.bf16.mxu0 0
    %92 = vmatpush1.bf16.msra.mxu0 0
    %93 = vmatprep.subr.bf16.mxu0 0
    %94 = vmatpush1.bf16.msra.mxu0 0
    %95 = vmatprep.subr.bf16.mxu0 0
    %96 = vmatpush1.bf16.msra.mxu0 0
    %97 = vmatprep.subr.bf16.mxu0 0
    %98 = vmatpush1.bf16.msra.mxu0 0
    %99 = vmatprep.subr.bf16.mxu0 0
    %100 = vmatpush1.bf16.msra.mxu0 0
    %101 = vmatprep.subr.bf16.mxu0 0
    %102 = vmatpush1.bf16.msra.mxu0 0
    %103 = vmatprep.mubr.bf16.mxu0 0
    %104 = vmatmul.mubr.bf16.gmra.mrb[0].mxu0 %v69
    %v105 = vpop.f32.mrb[0].mxu0
    %v106 = vadd.f32 %v53, %v105
    %v107 = vpop.f32.mrb[0].mxu0
    %v108 = vpop.f32.mrb[0].mxu0
    %v109 = vpop.f32.mrb[0].mxu0
    %110 = vdwg.mxu0
    %v111 = vpack.c.bf16 %v106, %v106
    %112 = vst [vmem:[#allocation7] sm:$0xf] %v111
    // Predicated region
    $region22: #{tpu_custom_call.1} parent=1 // pred_check
      _
    $region23: #{tpu_custom_call.1} parent=1 // pred_check_branch
      %114 = sbr.rel (0) target = $region25
    $region24: #{tpu_custom_call.1} parent=1 // pred_region
      %s116 = ssub.s32 64, 64
      %117 = vsyncadd [#allocation4], %s116
      %s119 = sshll.u32 [#allocation7], 4
      %s120 = int_to_ptr.vmem [resolvable:$true] %s119
      %122 = dma.vmem_to_hbm [thread:$0]  %s120, 64, %s3, [#allocation4]
    $region25: #{tpu_custom_call.1} parent=1 // pred_fallthru
      _
    // Predicated region
    $region26: #{tpu_custom_call.1} parent=1 // pred_check
      _
    $region27: #{tpu_custom_call.1} parent=1 // pred_check_branch
      %124 = sbr.rel (0) target = $region29
    $region28: #{tpu_custom_call.1} parent=1 // pred_region
      %125 = dma.done [#allocation4], 64
    $region29: #{tpu_custom_call.1} parent=1 // pred_fallthru
      _
    %126 = vsyncpa [#allocation3], 1
    %127 = vsyncpa [#allocation6], 1
    %128 = vsyncpa [#allocation4], 1

</llo_original>
